<compile_context>
chip_gen: v5e
topology: v5e:2x2
jax: 0.10.0
libtpu: 0.0.40
codegen_flags: <defaults>
</compile_context>

<pallas_src>
import jax
import jax.numpy as jnp
from jax.experimental import pallas as pl
from jax.experimental.pallas import tpu as pltpu


def _relu_conv_kernel(w_ref, p_ref, o_ref):
    # w_ref: (Cout, K)   dense weight tile, K = kH*kW*Cin
    # p_ref: (K, M)      im2col patches for one image, M = Ho*Wo (lane dim)
    # o_ref: (Cout, M)   lane-dense output, maps straight to flattened NCHW
    acc = jnp.dot(w_ref[...], p_ref[...], preferred_element_type=jnp.float32)
    o_ref[...] = jnp.maximum(acc, 0.0).astype(o_ref.dtype)  # fused ReLU


def relu_conv(x_nchw, weight_oihw, *, stride, padding):
    """Equivalent of nn.Conv2d(c_in, c_out, k, stride, padding, bias=False) + ReLU."""
    n, c_in, h, w = x_nchw.shape
    c_out, c_in_w, kh, kw = weight_oihw.shape
    assert c_in == c_in_w
    h_out = (h + 2 * padding - kh) // stride + 1
    w_out = (w + 2 * padding - kw) // stride + 1
    m = h_out * w_out
    kk = kh * kw * c_in

    # --- glue: zero-pad + im2col (layout plumbing, plain JAX) ----------------
    x_pad = jnp.pad(
        x_nchw, ((0, 0), (0, 0), (padding, padding), (padding, padding))
    )
    taps = []
    for ky in range(kh):
        for kx in range(kw):
            sl = x_pad[
                :, :,
                ky: ky + (h_out - 1) * stride + 1: stride,
                kx: kx + (w_out - 1) * stride + 1: stride,
            ]  # (N, Cin, Ho, Wo)  (striding handled here, not in-kernel)
            taps.append(sl.reshape(n, c_in, m))
    # tap-major / cin-minor ordering along K:
    patches = jnp.concatenate(taps, axis=1)  # (N, kH*kW*Cin, Ho*Wo)

    # Weight as one dense (Cout, kH*kW*Cin) tile with matching K ordering.
    w2d = jnp.transpose(weight_oihw, (0, 2, 3, 1)).reshape(c_out, kk)

    # --- Pallas call ---------------------------------------------------------
    out = pl.pallas_call(
        _relu_conv_kernel,
        out_shape=jax.ShapeDtypeStruct((n, c_out, m), x_nchw.dtype),
        grid_spec=pltpu.PrefetchScalarGridSpec(
            num_scalar_prefetch=0,
            grid=(n,),
            in_specs=[
                pl.BlockSpec((c_out, kk), lambda b: (0, 0)),        # weights (resident)
                pl.BlockSpec((None, kk, m), lambda b: (b, 0, 0)),   # patches for image b
            ],
            out_specs=pl.BlockSpec((None, c_out, m), lambda b: (b, 0, 0)),
        ),
        compiler_params=pltpu.CompilerParams(
            dimension_semantics=("parallel",),  # 2-wide parallel axis for v7x's 2 TCs
        ),
    )(w2d, patches)

    # (N, Cout, Ho*Wo) is flattened NCHW -> reshape only, no transpose.
    return out.reshape(n, c_out, h_out, w_out)


def _check(x, weight, *, stride, padding):
    out = relu_conv(x, weight, stride=stride, padding=padding)
    out = jax.block_until_ready(out)
    ref = jax.lax.conv_general_dilated(
        x, weight,
        window_strides=(stride, stride),
        padding=[(padding, padding), (padding, padding)],
        dimension_numbers=("NCHW", "OIHW", "NCHW"),
    )
    ref = jnp.maximum(ref, 0.0)
    assert out.shape == ref.shape, (out.shape, ref.shape)
    assert jnp.allclose(out, ref, rtol=1e-4, atol=1e-4), float(
        jnp.max(jnp.abs(out - ref))
    )


if __name__ == "__main__":
    key = jax.random.PRNGKey(0)
    k1, k2, k3, k4 = jax.random.split(key, 4)

    # Config 1: ReLUConv(c_in=4, c_out=8, kernel=3, stride=1, padding=1), NCHW input.
    n, c_in, c_out, h, w = 2, 4, 8, 16, 16
    x1 = jax.random.normal(k1, (n, c_in, h, w), dtype=jnp.float32)
    w1 = jax.random.normal(k2, (c_out, c_in, 3, 3), jnp.float32) * 0.1
    _check(x1, w1, stride=1, padding=1)

    # Config 2: module-style ReLUConv(c, c, 5, stride=2, padding=2) with c=10
    # (exercises the stride>1 path, now handled in the wrapper).
    c = 10
    x2 = jax.random.normal(k3, (n, c, h, w), dtype=jnp.float32)
    w2 = jax.random.normal(k4, (c, c, 5, 5), jnp.float32) * 0.1
    _check(x2, w2, stride=2, padding=2)

    # TODO(synk): only the ReLUConv building block of Fusion is implemented as a
    # Pallas kernel; the full Fusion graph composes such blocks in plain JAX.
    print("KERNEL_OK")
</pallas_src>

<mosaic_0001>
module attributes {stable_mosaic.version = 11 : i64} {
  func.func @_relu_conv_kernel(%arg0: i32, %arg1: memref<8x36xf32, #tpu.memory_space<vmem>>, %arg2: memref<1x36x256xf32, #tpu.memory_space<vmem>>, %arg3: memref<1x8x256xf32, #tpu.memory_space<vmem>>) attributes {dimension_semantics = [#tpu.dimension_semantics<parallel>], iteration_bounds = array<i64: 2>, scalar_prefetch = 0 : i64, scratch_operands = 0 : i64, tpu.core_type = #tpu.core_type<tc>, window_params = [{pipeline_mode = #tpu.pipeline_mode<synchronous>, transform_indices = @transform_0, window_bounds = array<i64: 8, 36>}, {transform_indices = @transform_1, window_bounds = array<i64: 1, 36, 256>}, {transform_indices = @transform_2, window_bounds = array<i64: 1, 8, 256>}]} {
    %c0 = arith.constant 0 : index
    %c0_0 = arith.constant 0 : index
    %0 = vector.load %arg1[%c0, %c0_0] : memref<8x36xf32, #tpu.memory_space<vmem>>, vector<8x36xf32>
    %c0_1 = arith.constant 0 : index
    %c0_2 = arith.constant 0 : index
    %c0_3 = arith.constant 0 : index
    %1 = vector.load %arg2[%c0_1, %c0_2, %c0_3] : memref<1x36x256xf32, #tpu.memory_space<vmem>>, vector<1x36x256xf32>
    %2 = vector.shape_cast %1 : vector<1x36x256xf32> to vector<36x256xf32>
    %cst = arith.constant dense<0.000000e+00> : vector<8x256xf32>
    %3 = tpu.matmul %0, %2, %cst {dimension_numbers = #tpu.dot_dimension_numbers<[1], [0], [0], [1], [0, 0, 1, 1], [], []>} : vector<8x36xf32>, vector<36x256xf32>, vector<8x256xf32> -> vector<8x256xf32>
    %cst_4 = arith.constant 0.000000e+00 : f32
    %4 = vector.broadcast %cst_4 : f32 to vector<8x256xf32>
    %5 = arith.maximumf %3, %4 : vector<8x256xf32>
    %c0_5 = arith.constant 0 : index
    %c0_6 = arith.constant 0 : index
    %c0_7 = arith.constant 0 : index
    %6 = vector.load %arg3[%c0_5, %c0_6, %c0_7] : memref<1x8x256xf32, #tpu.memory_space<vmem>>, vector<1x8x256xf32>
    %7 = vector.shape_cast %6 : vector<1x8x256xf32> to vector<8x256xf32>
    %8 = vector.shape_cast %5 : vector<8x256xf32> to vector<1x8x256xf32>
    tpu.vector_store %arg3[%c0_5, %c0_6, %c0_7], %8 {strides = array<i32>} : memref<1x8x256xf32, #tpu.memory_space<vmem>>, vector<1x8x256xf32>,
    return
  }
  func.func @transform_0(%arg0: i32) -> (i32, i32) {
    %c0_i32 = arith.constant 0 : i32
    %c0_i32_0 = arith.constant 0 : i32
    %c0_i32_1 = arith.constant 0 : i32
    return %c0_i32, %c0_i32_0 : i32, i32
  }
  func.func @transform_1(%arg0: i32) -> (i32, i32, i32) {
    %c0_i32 = arith.constant 0 : i32
    %c0_i32_0 = arith.constant 0 : i32
    %c0_i32_1 = arith.constant 0 : i32
    return %arg0, %c0_i32, %c0_i32_0 : i32, i32, i32
  }
  func.func @transform_2(%arg0: i32) -> (i32, i32, i32) {
    %c0_i32 = arith.constant 0 : i32
    %c0_i32_0 = arith.constant 0 : i32
    %c0_i32_1 = arith.constant 0 : i32
    return %arg0, %c0_i32, %c0_i32_0 : i32, i32, i32
  }
}

</mosaic_0001>

<llo_original>
// kernel: tpu_custom_call.1
$region0: #{tpu_custom_call.1}
  #allocation0 [shape = 'u32[]', space=smem, size = 0x4, offset = 0x4, fixed_abs, tag = 'smem constant byte address 0x4 - core index']
  #allocation1 [shape = 'u32[72,128]{1,0:T(1,128)}', space=vmem, size = 0x9000, scoped, tag = 'internal scratch']
  %s0 = inlined_call_operand.vmem [shape: f32[8,36], index: 0, kind: input, shape index: {}]
  %s1 = inlined_call_operand.vmem [shape: f32[2,36,256], index: 1, kind: input, shape index: {}]
  %s2 = inlined_call_operand.hbm [shape: f32[2,8,256], index: 2, kind: output, shape index: {}]
  %s3 = sld [smem:[#allocation0]]
  $region41: #{tpu_custom_call.1} parent=0
    _
  %s5 = ssub.s32 1, %s3
  %s6 = scalar_select 0, %s5, %s3
  $region1: #{tpu_custom_call.1} parent=0
    #allocation2 [shape = 'u8[16384]{0}', space=vmem, size = 0x4000, scoped, tag = 'output window, operand 0']
    #allocation3 [shape = 's32[2]{0}', space=sflag, size = 0x8, scoped, tag = 'scoped memory for tpu_custom_call.1']
    %7 = vsyncpa [#allocation3], 0
    %s8 = scalar_lea.sflag [#allocation3], 1
    %9 = vsyncpa %s8, 0
    loop: start=0, step=1, limit=4
    $region2: #{tpu_custom_call.1} parent=1 // loop_pre_header
      _
    $region3: #{tpu_custom_call.1} parent=1 // loop_header
      %s11 = sphi 0, %s15
      %p12 = scmp.ge.s32.totalorder %s11, 4
      %s19 = sphi 0, %s19
      %s21 = sphi 0, %s19
      %s22 = sphi 0, %s21
      %s36 = sphi 0, %s22
      %s42 = sphi 0, %s44
      %s45 = sphi 0, %s42
      %s46 = sphi 0, %s45
      %s62 = sphi 0, %s46
      %s68 = sphi 0, %s70
      %s71 = sphi 0, %s68
      %s72 = sphi 0, %s71
      %s88 = sphi 0, %s72
    $region4: #{tpu_custom_call.1} parent=1 // loop_header_branch
      %14 = sbr.rel (%p12) target = $region8
    $region5: #{tpu_custom_call.1} parent=1 // loop_body
      %s16 = ssub.s32 %s11, 1
      %s17 = ssub.s32 %s11, 2
      %s18 = sadd.s32 %s11, 1
      %s20 = sadd.s32 %s19, 1
      %p23 = scmp.eq.s32.totalorder %s11, 1
      %p24 = scmp.ne.s32.totalorder %s19, %s21
      %p25 = scmp.eq.s32.totalorder %s11, 0
      %p26 = por %p24, %p25
      %p27 = scmp.ne.s32.totalorder %s19, %s21
      %p28 = scmp.eq.s32.totalorder %s16, 1
      %p29 = por %p27, %p28
      %p30 = scmp.ne.s32.totalorder %s21, %s22
      %p31 = scmp.eq.s32.totalorder %s16, 0
      %p32 = por %p30, %p31
      %p33 = scmp.ne.s32.totalorder %s21, %s22
      %p34 = scmp.eq.s32.totalorder %s17, 1
      %p35 = por %p33, %p34
      %p37 = scmp.ne.s32.totalorder %s22, %s36
      %p38 = scmp.eq.s32.totalorder %s17, 0
      %p39 = por %p37, %p38
      %s40 = ssub.s32 %s11, %s18
      %p41 = scmp.eq.s32.totalorder %s40, 0
      %s43 = sadd.s32 %s42, 1
      %s44 = scalar_select %p41, %s42, %s43
      %p47 = pneg %p41
      %p48 = scmp.eq.s32.totalorder %s11, 1
      %p49 = por %p47, %p48
      %p50 = scmp.ne.s32.totalorder %s42, %s45
      %p51 = scmp.eq.s32.totalorder %s11, 0
      %p52 = por %p50, %p51
      %p53 = scmp.ne.s32.totalorder %s42, %s45
      %p54 = scmp.eq.s32.totalorder %s16, 1
      %p55 = por %p53, %p54
      %p56 = scmp.ne.s32.totalorder %s45, %s46
      %p57 = scmp.eq.s32.totalorder %s16, 0
      %p58 = por %p56, %p57
      %p59 = scmp.ne.s32.totalorder %s45, %s46
      %p60 = scmp.eq.s32.totalorder %s17, 1
      %p61 = por %p59, %p60
      %p63 = scmp.ne.s32.totalorder %s46, %s62
      %p64 = scmp.eq.s32.totalorder %s17, 0
      %p65 = por %p63, %p64
      %s66 = ssub.s32 %s11, %s18
      %p67 = scmp.eq.s32.totalorder %s66, 0
      %s69 = sadd.s32 %s68, 1
      %s70 = scalar_select %p67, %s68, %s69
      %p73 = pneg %p67
      %p74 = scmp.eq.s32.totalorder %s11, 1
      %p75 = por %p73, %p74
      %p76 = scmp.ne.s32.totalorder %s68, %s71
      %p77 = scmp.eq.s32.totalorder %s11, 0
      %p78 = por %p76, %p77
      %p79 = scmp.ne.s32.totalorder %s68, %s71
      %p80 = scmp.eq.s32.totalorder %s16, 1
      %p81 = por %p79, %p80
      %p82 = scmp.ne.s32.totalorder %s71, %s72
      %p83 = scmp.eq.s32.totalorder %s16, 0
      %p84 = por %p82, %p83
      %p85 = scmp.ne.s32.totalorder %s71, %s72
      %p86 = scmp.eq.s32.totalorder %s17, 1
      %p87 = por %p85, %p86
      %p89 = scmp.ne.s32.totalorder %s72, %s88
      %p90 = scmp.eq.s32.totalorder %s17, 0
      %p91 = por %p89, %p90
      %p92 = scmp.le.s32.totalorder 1, %s11
      %p93 = scmp.lt.s32.totalorder %s11, 3
      %p94 = pnand %p92, %p93
      %p95 = pneg %p94
      // Predicated region
      $region9: #{tpu_custom_call.1} parent=5 // pred_check
        _
      $region10: #{tpu_custom_call.1} parent=5 // pred_check_branch
        %97 = sbr.rel (%p94) target = $region12
      $region11: #{tpu_custom_call.1} parent=5 // pred_region
        %s98 = ssub.s32 %s11, 1
        // Predicated region
        $region13: #{tpu_custom_call.1} parent=11 // pred_check
          %p99 = pneg %p32
        $region14: #{tpu_custom_call.1} parent=11 // pred_check_branch
          %101 = sbr.rel (%p99) target = $region16
        $region15: #{tpu_custom_call.1} parent=11 // pred_region
          _
        $region16: #{tpu_custom_call.1} parent=11 // pred_fallthru
          _
      $region12: #{tpu_custom_call.1} parent=5 // pred_fallthru
        _
      %p102 = scmp.lt.s32.totalorder %s11, 2
      // Predicated region
      $region17: #{tpu_custom_call.1} parent=5 // pred_check
        %p103 = pneg %p102
      $region18: #{tpu_custom_call.1} parent=5 // pred_check_branch
        %105 = sbr.rel (%p103) target = $region20
      $region19: #{tpu_custom_call.1} parent=5 // pred_region
        // Predicated region
        $region21: #{tpu_custom_call.1} parent=19 // pred_check
          %p106 = pneg %p52
        $region22: #{tpu_custom_call.1} parent=19 // pred_check_branch
          %108 = sbr.rel (%p106) target = $region24
        $region23: #{tpu_custom_call.1} parent=19 // pred_region
          %p109 = scmp.lt.s32.totalorder %s11, 1
          %s110 = scalar_select %p109, %s11, 1
          %s111 = smul.addr %s110, 10
          %s112 = smul.addr %s111, 8
          %s113 = scalar_lea.vmem %s1, %s112
        $region24: #{tpu_custom_call.1} parent=19 // pred_fallthru
          _
      $region20: #{tpu_custom_call.1} parent=5 // pred_fallthru
        _
      %p114 = scmp.le.s32.totalorder 1, %s11
      %p115 = scmp.lt.s32.totalorder %s11, 3
      %p116 = pnand %p114, %p115
      %p117 = pneg %p116
      // Predicated region
      $region25: #{tpu_custom_call.1} parent=5 // pred_check
        _
      $region26: #{tpu_custom_call.1} parent=5 // pred_check_branch
        %119 = sbr.rel (%p116) target = $region28
      $region27: #{tpu_custom_call.1} parent=5 // pred_region
        %s120 = ssub.s32 %s11, 1
        %p121 = pneg %p32
        %p122 = pneg %p29
        %p123 = scmp.lt.s32.totalorder %s16, 1
        %s124 = scalar_select %p123, %s16, 1
        %s125 = smul.addr %s124, 10
        %s126 = smul.addr %s125, 8
        %s127 = scalar_lea.vmem %s1, %s126
        %p128 = pneg %p58
        %p129 = pneg %p55
        %p130 = pneg %p84
        %p131 = pneg %p81
        %s132 = sand.u32 %s71, 1
        %s133 = scalar_lea.sflag [#allocation3], %s132
        %s134 = sand.u32 %s71, 1
        %s135 = smul.addr %s134, 16
        %s136 = scalar_lea.vmem [#allocation2], %s135
        %p137 = scmp.lt.s32.totalorder %s16, 1
        %s138 = scalar_select %p137, %s16, 1
        %s139 = smul.addr %s138, 10
        %s140 = smul.addr %s139, 8
        %s141 = scalar_lea.vmem %s1, %s140
        %v142 = vld [vmem:[%s0] sm:$0xff]
        %v143 = vld [vmem:[%s141] sm:$0xff]
        %v144 = vld [vmem:[%s141 + $0x8] sm:$0xff]
        %v145 = vld [vmem:[%s141 + $0x10] sm:$0xff]
        %v146 = vld [vmem:[%s141 + $0x18] sm:$0xff]
        %v147 = vld [vmem:[%s141 + $0x20] sm:$0xff]
        %v148 = vld [vmem:[%s141 + $0x28] sm:$0xff]
        %v149 = vld [vmem:[%s141 + $0x30] sm:$0xff]
        %v150 = vld [vmem:[%s141 + $0x38] sm:$0xff]
        %v151 = vld [vmem:[%s141 + $0x40] sm:$0xf]
        %v152 = vld [vmem:[%s141 + $0x48] sm:$0xf]
        %vm153 = vcmask 293888
        %v155 = vsel %vm153, %v142, 0
        %vm157 = vcmask 1043456
        %v159 = vsel %vm157, %v151, 0
        %v162 = vsel %vm157, %v152, 0
        %164 = vmatpush.msra.mxu0 0.0
        %165 = vmatpush.msra.mxu0 0.0
        %166 = vmatpush.msra.mxu0 0.0
        %167 = vmatpush.msra.mxu0 0.0
        %168 = vmatpush.msra.mxu0 0.0
        %169 = vmatpush.msra.mxu0 0.0
        %170 = vmatpush.msra.mxu0 0.0
        %171 = vmatpush.msra.mxu0 0.0
        %172 = vmatpush.msra.mxu0 0.0
        %173 = vmatpush.msra.mxu0 0.0
        %174 = vmatpush.msra.mxu0 0.0
        %175 = vmatpush.msra.mxu0 %v159
        %176 = vmatpush.msra.mxu0 %v149
        %177 = vmatpush.msra.mxu0 %v147
        %178 = vmatpush.msra.mxu0 %v145
        %179 = vmatpush.msra.mxu0 %v143
        %180 = vmatmul.f32.gmra.mxu0 %v155
        %v181 = vpop.f32.mrf.mxu0
        %v182 = vadd.f32 0.0, %v181
        %183 = vdwg.mxu0
        %184 = vmatpush.msra.mxu0 0.0
        %185 = vmatpush.msra.mxu0 0.0
        %186 = vmatpush.msra.mxu0 0.0
        %187 = vmatpush.msra.mxu0 0.0
        %188 = vmatpush.msra.mxu0 0.0
        %189 = vmatpush.msra.mxu0 0.0
        %190 = vmatpush.msra.mxu0 0.0
        %191 = vmatpush.msra.mxu0 0.0
        %192 = vmatpush.msra.mxu0 0.0
        %193 = vmatpush.msra.mxu0 0.0
        %194 = vmatpush.msra.mxu0 0.0
        %195 = vmatpush.msra.mxu0 %v162
        %196 = vmatpush.msra.mxu0 %v150
        %197 = vmatpush.msra.mxu0 %v148
        %198 = vmatpush.msra.mxu0 %v146
        %199 = vmatpush.msra.mxu0 %v144
        %200 = vmatmul.f32.gmra.mxu0 %v155
        %v201 = vpop.f32.mrf.mxu0
        %v202 = vadd.f32 0.0, %v201
        %203 = vdwg.mxu0
        %v204 = vmax.f32 %v182, 0.0
        %v205 = vmax.f32 %v202, 0.0
        %206 = vst [vmem:[%s136] sm:$0xff] %v204
        %207 = vst [vmem:[%s136 + $0x8] sm:$0xff] %v205
        %s208 = sand.u32 %s71, 1
        %s209 = scalar_lea.sflag [#allocation3], %s208
        %s210 = sand.u32 %s71, 1
        %s211 = smul.addr %s210, 16
        %s212 = scalar_lea.vmem [#allocation2], %s211
        // Predicated region
        $region29: #{tpu_custom_call.1} parent=27 // pred_check
          %p213 = pneg %p81
        $region30: #{tpu_custom_call.1} parent=27 // pred_check_branch
          %215 = sbr.rel (%p213) target = $region32
        $region31: #{tpu_custom_call.1} parent=27 // pred_region
          %217 = vsyncadd %s209, 0
          %s218 = smul.addr %s16, 2
          %s219 = smul.addr %s218, 8
          %s220 = scalar_lea.hbm %s2, %s219
          %s222 = sshll.u32 %s212, 4
          %s223 = int_to_ptr.vmem [resolvable:$true] %s222
          %s224 = sshll.u32 %s220, 4
          %s225 = int_to_ptr.hbm [resolvable:$true] %s224
          %227 = dma.vmem_to_hbm [thread:$0]  %s223, 256, %s225, %s209
        $region32: #{tpu_custom_call.1} parent=27 // pred_fallthru
          _
      $region28: #{tpu_custom_call.1} parent=5 // pred_fallthru
        _
      %p228 = scmp.le.s32.totalorder 2, %s11
      // Predicated region
      $region33: #{tpu_custom_call.1} parent=5 // pred_check
        %p229 = pneg %p228
      $region34: #{tpu_custom_call.1} parent=5 // pred_check_branch
        %231 = sbr.rel (%p229) target = $region36
      $region35: #{tpu_custom_call.1} parent=5 // pred_region
        %s232 = ssub.s32 %s11, 2
        // Predicated region
        $region37: #{tpu_custom_call.1} parent=35 // pred_check
          %p233 = pneg %p87
        $region38: #{tpu_custom_call.1} parent=35 // pred_check_branch
          %235 = sbr.rel (%p233) target = $region40
        $region39: #{tpu_custom_call.1} parent=35 // pred_region
          %s236 = sand.u32 %s72, 1
          %s237 = scalar_lea.sflag [#allocation3], %s236
          %s238 = sand.u32 %s72, 1
          %s239 = smul.addr %s238, 16
          %s240 = scalar_lea.vmem [#allocation2], %s239
          %242 = dma.done %s237, 256
        $region40: #{tpu_custom_call.1} parent=35 // pred_fallthru
          _
      $region36: #{tpu_custom_call.1} parent=5 // pred_fallthru
        _
    $region6: #{tpu_custom_call.1} parent=1 // loop_footer
      %s15 = sadd.s32 1, %s11
    $region7: #{tpu_custom_call.1} parent=1 // loop_footer_branch
      %10 = sbr.rel target = $region3
    $region8: #{tpu_custom_call.1} parent=1 // loop_exit
      _
    %243 = vsyncpa [#allocation3], 1
    %s244 = scalar_lea.sflag [#allocation3], 1
    %245 = vsyncpa %s244, 1

</llo_original>
